<compile_context>
chip_gen: v5e
topology: v5e:2x2
jax: 0.10.0
libtpu: 0.0.40
codegen_flags: <defaults>
</compile_context>

<pallas_src>
import functools

import jax
import jax.numpy as jnp
from jax.experimental import pallas as pl
from jax.experimental.pallas import tpu as pltpu


def _layernorm_kernel(x_ref, g_ref, b_ref, o_ref, *, eps, affine, n):
    # x_ref: (TB, D) block holding TB full samples; g_ref/b_ref: (1, D).
    x = x_ref[...].astype(jnp.float32)

    # One-pass stats: sum and sum of squares (f32 accumulation).
    s = jnp.sum(x, axis=1, keepdims=True)            # (TB, 1)
    ss = jnp.sum(x * x, axis=1, keepdims=True)       # (TB, 1)
    mean = s * (1.0 / n)
    # torch.std default is unbiased (divide by N-1).
    var = (ss - n * (mean * mean)) * (1.0 / (n - 1))
    var = jnp.maximum(var, 0.0)                      # guard fp cancellation
    std = jnp.sqrt(var)

    # Per-sample reciprocal replaces the per-element divide.
    inv = pl.reciprocal(std + eps, approx=False)     # (TB, 1)

    y = (x - mean) * inv
    if affine:
        y = y * g_ref[...].astype(jnp.float32) + b_ref[...].astype(jnp.float32)
    o_ref[...] = y.astype(o_ref.dtype)


def _choose_rows_per_block(batch, row_elems, itemsize, target_bytes=2 << 20):
    """Pick how many samples to pack per grid step (~target_bytes per block)."""
    max_rows = max(1, target_bytes // max(1, row_elems * itemsize))
    if max_rows >= batch:
        return batch
    divisors = [d for d in range(1, max_rows + 1) if batch % d == 0]
    aligned = [d for d in divisors if d % 8 == 0]    # sublane-aligned preferred
    return (aligned or divisors)[-1]


def layernorm(x, gamma=None, beta=None, *, eps=1e-5, affine=True):
    """x: (B, C, H, W); gamma/beta: (C,). Matches the PyTorch LayerNorm module
    (per-sample mean/unbiased-std over all non-batch dims, eps added to std)."""
    B, C, H, W = x.shape
    HW = H * W
    D = C * HW

    x2 = x.reshape(B, D)
    if affine:
        g2 = jnp.broadcast_to(gamma.astype(x.dtype)[:, None], (C, HW)).reshape(1, D)
        b2 = jnp.broadcast_to(beta.astype(x.dtype)[:, None], (C, HW)).reshape(1, D)
    else:
        g2 = jnp.ones((1, D), x.dtype)
        b2 = jnp.zeros((1, D), x.dtype)

    TB = _choose_rows_per_block(B, D, jnp.dtype(x.dtype).itemsize)
    grid = (B // TB,)

    kernel = functools.partial(_layernorm_kernel, eps=eps, affine=affine, n=D)

    out = pl.pallas_call(
        kernel,
        out_shape=jax.ShapeDtypeStruct((B, D), x.dtype),
        grid_spec=pltpu.PrefetchScalarGridSpec(
            num_scalar_prefetch=0,
            grid=grid,
            in_specs=[
                pl.BlockSpec((TB, D), lambda i: (i, 0)),
                pl.BlockSpec((1, D), lambda i: (0, 0)),
                pl.BlockSpec((1, D), lambda i: (0, 0)),
            ],
            out_specs=pl.BlockSpec((TB, D), lambda i: (i, 0)),
        ),
        compiler_params=pltpu.CompilerParams(
            dimension_semantics=("parallel",),
            vmem_limit_bytes=64 * 1024 * 1024,
        ),
    )(x2, g2, b2)
    return out.reshape(B, C, H, W)


def layernorm_ref(x, gamma, beta, *, eps=1e-5, affine=True):
    B = x.shape[0]
    xf = x.reshape(B, -1).astype(jnp.float32)
    mean = xf.mean(axis=1)
    var = jnp.sum((xf - mean[:, None]) ** 2, axis=1) / (xf.shape[1] - 1)
    std = jnp.sqrt(var)
    shape = (B,) + (1,) * (x.ndim - 1)
    y = (x - mean.reshape(shape)) / (std.reshape(shape) + eps)
    if affine:
        cshape = (1, -1) + (1,) * (x.ndim - 2)
        y = y * gamma.reshape(cshape) + beta.reshape(cshape)
    return y


if __name__ == "__main__":
    B, C, H, W = 2, 4, 16, 16
    key = jax.random.PRNGKey(0)
    kx, kg = jax.random.split(key)

    x = jax.random.normal(kx, (B, C, H, W), dtype=jnp.float32)
    # nn.Parameter(torch.Tensor(C).uniform_()) -> uniform [0,1); beta = zeros
    gamma = jax.random.uniform(kg, (C,), dtype=jnp.float32)
    beta = jnp.zeros((C,), dtype=jnp.float32)

    out = layernorm(x, gamma, beta, eps=1e-5, affine=True)
    out = jax.block_until_ready(out)

    ref = layernorm_ref(x, gamma, beta, eps=1e-5, affine=True)
    assert out.shape == (B, C, H, W)
    assert jnp.allclose(out, ref, atol=1e-4, rtol=1e-4), "mismatch vs reference"

    print("KERNEL_OK")
</pallas_src>

<mosaic_0001>
module attributes {stable_mosaic.version = 11 : i64} {
  func.func @_layernorm_kernel(%arg0: i32, %arg1: memref<2x1024xf32, #tpu.memory_space<vmem>>, %arg2: memref<1x1024xf32, #tpu.memory_space<vmem>>, %arg3: memref<1x1024xf32, #tpu.memory_space<vmem>>, %arg4: memref<2x1024xf32, #tpu.memory_space<vmem>>) attributes {dimension_semantics = [#tpu.dimension_semantics<parallel>], iteration_bounds = array<i64: 1>, scalar_prefetch = 0 : i64, scratch_operands = 0 : i64, tpu.core_type = #tpu.core_type<tc>, window_params = [{transform_indices = @transform_0, window_bounds = array<i64: 2, 1024>}, {pipeline_mode = #tpu.pipeline_mode<synchronous>, transform_indices = @transform_1, window_bounds = array<i64: 1, 1024>}, {pipeline_mode = #tpu.pipeline_mode<synchronous>, transform_indices = @transform_2, window_bounds = array<i64: 1, 1024>}, {transform_indices = @transform_3, window_bounds = array<i64: 2, 1024>}]} {
    %c0 = arith.constant 0 : index
    %c0_0 = arith.constant 0 : index
    %0 = vector.load %arg1[%c0, %c0_0] : memref<2x1024xf32, #tpu.memory_space<vmem>>, vector<2x1024xf32>
    %cst = arith.constant dense<0.000000e+00> : vector<2xf32>
    %1 = vector.multi_reduction <add>, %0, %cst [1] : vector<2x1024xf32> to vector<2xf32>
    %2 = vector.shape_cast %1 : vector<2xf32> to vector<2x1xf32>
    %3 = arith.mulf %0, %0 : vector<2x1024xf32>
    %cst_1 = arith.constant dense<0.000000e+00> : vector<2xf32>
    %4 = vector.multi_reduction <add>, %3, %cst_1 [1] : vector<2x1024xf32> to vector<2xf32>
    %5 = vector.shape_cast %4 : vector<2xf32> to vector<2x1xf32>
    %cst_2 = arith.constant 9.765625E-4 : f32
    %6 = vector.broadcast %cst_2 : f32 to vector<2x1xf32>
    %7 = arith.mulf %2, %6 : vector<2x1xf32>
    %8 = arith.mulf %7, %7 : vector<2x1xf32>
    %cst_3 = arith.constant 1.024000e+03 : f32
    %9 = vector.broadcast %cst_3 : f32 to vector<2x1xf32>
    %10 = arith.mulf %9, %8 : vector<2x1xf32>
    %11 = arith.subf %5, %10 : vector<2x1xf32>
    %cst_4 = arith.constant 9.77517105E-4 : f32
    %12 = vector.broadcast %cst_4 : f32 to vector<2x1xf32>
    %13 = arith.mulf %11, %12 : vector<2x1xf32>
    %cst_5 = arith.constant 0.000000e+00 : f32
    %14 = vector.broadcast %cst_5 : f32 to vector<2x1xf32>
    %15 = arith.maximumf %13, %14 : vector<2x1xf32>
    %16 = math.sqrt %15 : vector<2x1xf32>
    %cst_6 = arith.constant 9.99999974E-6 : f32
    %17 = vector.broadcast %cst_6 : f32 to vector<2x1xf32>
    %18 = arith.addf %16, %17 : vector<2x1xf32>
    %19 = tpu.reciprocal %18 : vector<2x1xf32> -> vector<2x1xf32>
    %20 = vector.broadcast %7 : vector<2x1xf32> to vector<2x1024xf32>
    %21 = arith.subf %0, %20 : vector<2x1024xf32>
    %22 = vector.broadcast %19 : vector<2x1xf32> to vector<2x1024xf32>
    %23 = arith.mulf %21, %22 : vector<2x1024xf32>
    %c0_7 = arith.constant 0 : index
    %c0_8 = arith.constant 0 : index
    %24 = vector.load %arg2[%c0_7, %c0_8] : memref<1x1024xf32, #tpu.memory_space<vmem>>, vector<1x1024xf32>
    %25 = vector.broadcast %24 : vector<1x1024xf32> to vector<2x1024xf32>
    %26 = arith.mulf %23, %25 : vector<2x1024xf32>
    %c0_9 = arith.constant 0 : index
    %c0_10 = arith.constant 0 : index
    %27 = vector.load %arg3[%c0_9, %c0_10] : memref<1x1024xf32, #tpu.memory_space<vmem>>, vector<1x1024xf32>
    %28 = vector.broadcast %27 : vector<1x1024xf32> to vector<2x1024xf32>
    %29 = arith.addf %26, %28 : vector<2x1024xf32>
    %c0_11 = arith.constant 0 : index
    %c0_12 = arith.constant 0 : index
    %30 = vector.load %arg4[%c0_11, %c0_12] : memref<2x1024xf32, #tpu.memory_space<vmem>>, vector<2x1024xf32>
    tpu.vector_store %arg4[%c0_11, %c0_12], %29 {strides = array<i32>} : memref<2x1024xf32, #tpu.memory_space<vmem>>, vector<2x1024xf32>,
    return
  }
  func.func @transform_0(%arg0: i32) -> (i32, i32) {
    %c0_i32 = arith.constant 0 : i32
    %c0_i32_0 = arith.constant 0 : i32
    return %arg0, %c0_i32 : i32, i32
  }
  func.func @transform_1(%arg0: i32) -> (i32, i32) {
    %c0_i32 = arith.constant 0 : i32
    %c0_i32_0 = arith.constant 0 : i32
    %c0_i32_1 = arith.constant 0 : i32
    return %c0_i32, %c0_i32_0 : i32, i32
  }
  func.func @transform_2(%arg0: i32) -> (i32, i32) {
    %c0_i32 = arith.constant 0 : i32
    %c0_i32_0 = arith.constant 0 : i32
    %c0_i32_1 = arith.constant 0 : i32
    return %c0_i32, %c0_i32_0 : i32, i32
  }
  func.func @transform_3(%arg0: i32) -> (i32, i32) {
    %c0_i32 = arith.constant 0 : i32
    %c0_i32_0 = arith.constant 0 : i32
    return %arg0, %c0_i32 : i32, i32
  }
}

</mosaic_0001>

<llo_original>
// kernel: tpu_custom_call.1
$region0: #{tpu_custom_call.1}
  #allocation0 [shape = 'u32[]', space=smem, size = 0x4, offset = 0x4, fixed_abs, tag = 'smem constant byte address 0x4 - core index']
  #allocation1 [shape = 'u32[72,128]{1,0:T(1,128)}', space=vmem, size = 0x9000, scoped, tag = 'internal scratch']
  %s0 = inlined_call_operand.hbm [shape: f32[2,1024], index: 0, kind: input, shape index: {}]
  %s1 = inlined_call_operand.hbm [shape: f32[1,1024], index: 1, kind: input, shape index: {}]
  %s2 = inlined_call_operand.hbm [shape: f32[1,1024], index: 2, kind: input, shape index: {}]
  %s3 = inlined_call_operand.hbm [shape: f32[2,1024], index: 3, kind: output, shape index: {}]
  %s4 = sld [smem:[#allocation0]]
  $region34: #{tpu_custom_call.1} parent=0
    _
  %s6 = ssub.s32 1, %s4
  %s7 = scalar_select 0, %s6, %s4
  $region1: #{tpu_custom_call.1} parent=0
    #allocation2 [shape = 'u8[8192]{0}', space=vmem, size = 0x2000, scoped, tag = 'input window, operand 0, single buffered']
    #allocation3 [shape = 's32[1]{0}', space=sflag, size = 0x4, scoped, tag = 'scoped memory for tpu_custom_call.1']
    #allocation4 [shape = 's32[1]{0}', space=sflag, size = 0x4, scoped, tag = 'scoped memory for tpu_custom_call.1']
    #allocation5 [shape = 'u8[4096]{0}', space=vmem, size = 0x1000, scoped, tag = 'input window, operand 1, single buffered']
    #allocation6 [shape = 's32[1]{0}', space=sflag, size = 0x4, scoped, tag = 'scoped memory for tpu_custom_call.1']
    #allocation7 [shape = 'u8[4096]{0}', space=vmem, size = 0x1000, scoped, tag = 'input window, operand 2, single buffered']
    #allocation8 [shape = 'u8[8192]{0}', space=vmem, size = 0x2000, scoped, tag = 'output window, operand 0, single buffered']
    %8 = vsyncpa [#allocation3], 0
    %9 = vsyncpa [#allocation6], 0
    %10 = vsyncpa [#allocation4], 0
    // Predicated region
    $region2: #{tpu_custom_call.1} parent=1 // pred_check
      _
    $region3: #{tpu_custom_call.1} parent=1 // pred_check_branch
      %12 = sbr.rel (0) target = $region5
    $region4: #{tpu_custom_call.1} parent=1 // pred_region
      %14 = vsyncadd [#allocation3], 0
      %s16 = sshll.u32 %s0, 4
      %s17 = int_to_ptr.hbm [resolvable:$true] %s16
      %s18 = sshll.u32 [#allocation2], 4
      %s19 = int_to_ptr.vmem [resolvable:$true] %s18
      %21 = dma.hbm_to_vmem [thread:$0]  %s17, 256, %s19, [#allocation3]
    $region5: #{tpu_custom_call.1} parent=1 // pred_fallthru
      _
    // Predicated region
    $region6: #{tpu_custom_call.1} parent=1 // pred_check
      _
    $region7: #{tpu_custom_call.1} parent=1 // pred_check_branch
      %23 = sbr.rel (0) target = $region9
    $region8: #{tpu_custom_call.1} parent=1 // pred_region
      %25 = vsyncadd [#allocation6], 0
      %s27 = sshll.u32 %s1, 4
      %s28 = int_to_ptr.hbm [resolvable:$true] %s27
      %s29 = sshll.u32 [#allocation5], 4
      %s30 = int_to_ptr.vmem [resolvable:$true] %s29
      %32 = dma.hbm_to_vmem [thread:$0]  %s28, 128, %s30, [#allocation6]
    $region9: #{tpu_custom_call.1} parent=1 // pred_fallthru
      _
    // Predicated region
    $region10: #{tpu_custom_call.1} parent=1 // pred_check
      _
    $region11: #{tpu_custom_call.1} parent=1 // pred_check_branch
      %34 = sbr.rel (0) target = $region13
    $region12: #{tpu_custom_call.1} parent=1 // pred_region
      %36 = vsyncadd [#allocation6], 0
      %s38 = sshll.u32 %s2, 4
      %s39 = int_to_ptr.hbm [resolvable:$true] %s38
      %s40 = sshll.u32 [#allocation7], 4
      %s41 = int_to_ptr.vmem [resolvable:$true] %s40
      %43 = dma.hbm_to_vmem [thread:$0]  %s39, 128, %s41, [#allocation6]
    $region13: #{tpu_custom_call.1} parent=1 // pred_fallthru
      _
    // Predicated region
    $region14: #{tpu_custom_call.1} parent=1 // pred_check
      _
    $region15: #{tpu_custom_call.1} parent=1 // pred_check_branch
      %45 = sbr.rel (0) target = $region17
    $region16: #{tpu_custom_call.1} parent=1 // pred_region
      %47 = dma.done [#allocation3], 256
    $region17: #{tpu_custom_call.1} parent=1 // pred_fallthru
      _
    // Predicated region
    $region18: #{tpu_custom_call.1} parent=1 // pred_check
      _
    $region19: #{tpu_custom_call.1} parent=1 // pred_check_branch
      %49 = sbr.rel (0) target = $region21
    $region20: #{tpu_custom_call.1} parent=1 // pred_region
      %51 = dma.done [#allocation6], 128
    $region21: #{tpu_custom_call.1} parent=1 // pred_fallthru
      _
    // Predicated region
    $region22: #{tpu_custom_call.1} parent=1 // pred_check
      _
    $region23: #{tpu_custom_call.1} parent=1 // pred_check_branch
      %53 = sbr.rel (0) target = $region25
    $region24: #{tpu_custom_call.1} parent=1 // pred_region
      %55 = dma.done [#allocation6], 128
    $region25: #{tpu_custom_call.1} parent=1 // pred_fallthru
      _
    %v56 = vld [vmem:[#allocation2] sm:$0xff]
    %v57 = vld [vmem:[#allocation2 + $0x8] sm:$0xff]
    %60 = vst [vmem:[#allocation1] ss:$4 sm:$0xff] %v56
    %s61 = scalar_lea.vmem [#allocation1], 32
    %62 = vst [vmem:[%s61] ss:$4 sm:$0xff] %v57
    %v63 = vld.sshfl [vmem:[#allocation1] sm:$0xff pattern:$0x73625140]
    %v64 = vld.sshfl [vmem:[#allocation1 + $0x8] sm:$0xff pattern:$0x73625140]
    %v65 = vld.sshfl [vmem:[#allocation1 + $0x10] sm:$0xff pattern:$0x73625140]
    %v66 = vld.sshfl [vmem:[#allocation1 + $0x18] sm:$0xff pattern:$0x73625140]
    %v67 = vld.sshfl [vmem:[#allocation1 + $0x20] sm:$0xff pattern:$0x73625140]
    %v68 = vld.sshfl [vmem:[#allocation1 + $0x28] sm:$0xff pattern:$0x73625140]
    %v69 = vld.sshfl [vmem:[#allocation1 + $0x30] sm:$0xff pattern:$0x73625140]
    %v70 = vld.sshfl [vmem:[#allocation1 + $0x38] sm:$0xff pattern:$0x73625140]
    %vm79 = vcmask 1041408
    %v80 = vsel %vm79, %v63, 0.0
    %v81 = vsel %vm79, %v64, 0.0
    %v82 = vadd.f32 %v80, %v81
    %v83 = vsel %vm79, %v65, 0.0
    %v84 = vadd.f32 %v82, %v83
    %v85 = vsel %vm79, %v66, 0.0
    %v86 = vadd.f32 %v84, %v85
    %v87 = vsel %vm79, %v67, 0.0
    %v88 = vadd.f32 %v86, %v87
    %v89 = vsel %vm79, %v68, 0.0
    %v90 = vadd.f32 %v88, %v89
    %v91 = vsel %vm79, %v69, 0.0
    %v92 = vadd.f32 %v90, %v91
    %v93 = vsel %vm79, %v70, 0.0
    %v94 = vadd.f32 %v92, %v93
    %95 = vadd.xlane.f32.xlu0 %v94
    %v96 = vpop.xlane.xlu0 %95
    %v97 = vmul.f32 %v56, %v56
    %v98 = vmul.f32 %v57, %v57
    %101 = vst [vmem:[#allocation1] ss:$4 sm:$0xff] %v97
    %s102 = scalar_lea.vmem [#allocation1], 32
    %103 = vst [vmem:[%s102] ss:$4 sm:$0xff] %v98
    %v104 = vld.sshfl [vmem:[#allocation1] sm:$0xff pattern:$0x73625140]
    %v105 = vld.sshfl [vmem:[#allocation1 + $0x8] sm:$0xff pattern:$0x73625140]
    %v106 = vld.sshfl [vmem:[#allocation1 + $0x10] sm:$0xff pattern:$0x73625140]
    %v107 = vld.sshfl [vmem:[#allocation1 + $0x18] sm:$0xff pattern:$0x73625140]
    %v108 = vld.sshfl [vmem:[#allocation1 + $0x20] sm:$0xff pattern:$0x73625140]
    %v109 = vld.sshfl [vmem:[#allocation1 + $0x28] sm:$0xff pattern:$0x73625140]
    %v110 = vld.sshfl [vmem:[#allocation1 + $0x30] sm:$0xff pattern:$0x73625140]
    %v111 = vld.sshfl [vmem:[#allocation1 + $0x38] sm:$0xff pattern:$0x73625140]
    %v120 = vsel %vm79, %v104, 0.0
    %v121 = vsel %vm79, %v105, 0.0
    %v122 = vadd.f32 %v120, %v121
    %v123 = vsel %vm79, %v106, 0.0
    %v124 = vadd.f32 %v122, %v123
    %v125 = vsel %vm79, %v107, 0.0
    %v126 = vadd.f32 %v124, %v125
    %v127 = vsel %vm79, %v108, 0.0
    %v128 = vadd.f32 %v126, %v127
    %v129 = vsel %vm79, %v109, 0.0
    %v130 = vadd.f32 %v128, %v129
    %v131 = vsel %vm79, %v110, 0.0
    %v132 = vadd.f32 %v130, %v131
    %v133 = vsel %vm79, %v111, 0.0
    %v134 = vadd.f32 %v132, %v133
    %135 = vadd.xlane.f32.xlu0 %v134
    %v136 = vpop.xlane.xlu0 %135
    %v137 = vmul.f32 %v96, 0.0009765625
    %v138 = vmul.f32 %v137, %v137
    %v139 = vmul.f32 %v138, 1024.0
    %v140 = vsub.f32 %v136, %v139
    %v141 = vmul.f32 %v140, 0.0009775171
    %v142 = vmax.f32 %v141, 0.0
    %v143 = vrsqrt.pop %v142
    %v144 = vmul.f32 %v143, %v142
    %v145 = vmul.f32 %v144, %v143
    %v146 = vmul.f32 0.5, %v145
    %v147 = vsub.f32 1.5, %v146
    %v148 = vmul.f32 %v143, %v147
    %v149 = vmul.f32 %v142, %v148
    %vm150 = vcmp.eq.f32.partialorder %v142, inf
    %v151 = vsel %vm150, %v142, %v149
    %vm152 = vcmp.eq.f32.partialorder %v142, 0.0
    %v153 = vand.u32 %v142, 2147483648
    %v154 = vsel %vm152, %v153, %v151
    %v155 = vadd.f32 %v154, 1e-05
    %v156 = vrcp.pop %v155
    %v157 = vmul.f32 %v155, %v156
    %v158 = vsub.f32 1.0, %v157
    %v159 = vmul.f32 %v156, %v158
    %v160 = vadd.f32 %v156, %v159
    %vm161 = vweird.f32 %v155
    %vm162 = vweird.f32 %v156
    %vm163 = vmor %vm161, %vm162
    %v164 = vsel %vm163, %v156, %v160
    %v165 = vand.u32 2147483647, %v155
    %vm166 = vcmp.eq.f32.partialorder %v165, 8.507059e+37
    %v167 = vand.u32 %v155, 2147483648
    %v168 = vor.u32 1.1754944e-38, %v167
    %v169 = vsel %vm166, %v168, %v164
    %v172 = vunpack.c.l.s4 269488144
    %v173 = vunpack.c.0.s8 %v172
    %v174 = vperm.slane %v137, %v173
    %v176 = vsub.f32 %v56, %v174
    %v177 = vsub.f32 %v57, %v174
    %v180 = vunpack.c.l.s4 269488144
    %v181 = vunpack.c.0.s8 %v180
    %v182 = vperm.slane %v169, %v181
    %v184 = vmul.f32 %v176, %v182
    %v185 = vmul.f32 %v177, %v182
    %v186 = vld [vmem:[#allocation5] sm:$0xff]
    %v188 = vperm.slane %v186, 0
    %v189 = vperm.slane %v186, 1
    %v190 = vperm.slane %v186, 2
    %v191 = vperm.slane %v186, 3
    %v192 = vperm.slane %v186, 4
    %v193 = vperm.slane %v186, 5
    %v194 = vperm.slane %v186, 6
    %v195 = vperm.slane %v186, 7
    %v196 = vrot.slane %v189, 6
    %v197 = vrot.slane %v190, 4
    %v198 = vrot.slane %v191, 2
    %v199 = vrot.slane %v193, 6
    %v200 = vrot.slane %v194, 4
    %v201 = vrot.slane %v195, 2
    %v202 = vsel %vm79, %v188, %v196
    %vm203 = vcmask 1045508
    %v204 = vsel %vm203, %v197, %v198
    %vm205 = vcmask 1043456
    %v206 = vsel %vm205, %v202, %v204
    %v207 = vsel %vm79, %v192, %v199
    %v208 = vsel %vm203, %v200, %v201
    %v209 = vsel %vm205, %v207, %v208
    %v212 = vmul.f32 %v184, %v206
    %v213 = vmul.f32 %v185, %v209
    %v214 = vld [vmem:[#allocation7] sm:$0xff]
    %v216 = vperm.slane %v214, 0
    %v217 = vperm.slane %v214, 1
    %v218 = vperm.slane %v214, 2
    %v219 = vperm.slane %v214, 3
    %v220 = vperm.slane %v214, 4
    %v221 = vperm.slane %v214, 5
    %v222 = vperm.slane %v214, 6
    %v223 = vperm.slane %v214, 7
    %v224 = vrot.slane %v217, 6
    %v225 = vrot.slane %v218, 4
    %v226 = vrot.slane %v219, 2
    %v227 = vrot.slane %v221, 6
    %v228 = vrot.slane %v222, 4
    %v229 = vrot.slane %v223, 2
    %v230 = vsel %vm79, %v216, %v224
    %v231 = vsel %vm203, %v225, %v226
    %v232 = vsel %vm205, %v230, %v231
    %v233 = vsel %vm79, %v220, %v227
    %v234 = vsel %vm203, %v228, %v229
    %v235 = vsel %vm205, %v233, %v234
    %v238 = vadd.f32 %v212, %v232
    %v239 = vadd.f32 %v213, %v235
    %240 = vst [vmem:[#allocation8] sm:$0xff] %v238
    %241 = vst [vmem:[#allocation8 + $0x8] sm:$0xff] %v239
    // Predicated region
    $region26: #{tpu_custom_call.1} parent=1 // pred_check
      _
    $region27: #{tpu_custom_call.1} parent=1 // pred_check_branch
      %243 = sbr.rel (0) target = $region29
    $region28: #{tpu_custom_call.1} parent=1 // pred_region
      %245 = vsyncadd [#allocation4], 0
      %s247 = sshll.u32 [#allocation8], 4
      %s248 = int_to_ptr.vmem [resolvable:$true] %s247
      %s249 = sshll.u32 %s3, 4
      %s250 = int_to_ptr.hbm [resolvable:$true] %s249
      %252 = dma.vmem_to_hbm [thread:$0]  %s248, 256, %s250, [#allocation4]
    $region29: #{tpu_custom_call.1} parent=1 // pred_fallthru
      _
    // Predicated region
    $region30: #{tpu_custom_call.1} parent=1 // pred_check
      _
    $region31: #{tpu_custom_call.1} parent=1 // pred_check_branch
      %254 = sbr.rel (0) target = $region33
    $region32: #{tpu_custom_call.1} parent=1 // pred_region
      %256 = dma.done [#allocation4], 256
    $region33: #{tpu_custom_call.1} parent=1 // pred_fallthru
      _
    %257 = vsyncpa [#allocation3], 1
    %258 = vsyncpa [#allocation6], 1
    %259 = vsyncpa [#allocation4], 1

</llo_original>
